<compile_context>
chip_gen: v6e
topology: v6e:2x2x1
jax: 0.10.0
libtpu: 0.0.40
codegen_flags: <defaults>
</compile_context>

<pallas_src>
import math

import jax
import jax.numpy as jnp
from jax.experimental import pallas as pl
from jax.experimental.pallas import tpu as pltpu


_LANE = 128
_SUBLANE = {4: 8, 2: 16, 1: 32}  # itemsize -> sublane tile


def _pe_table(max_cell, emb_dim):
    """pe[pos, j] in fp32: sin for even j, cos for odd j (hoisted out of kernel)."""
    j = jnp.arange(emb_dim)
    # angles[1::2] = angles[0::2]  ->  exponent uses 2 * floor(j / 2)
    expo = ((j // 2) * 2).astype(jnp.float32) / jnp.float32(emb_dim)
    rates = jnp.exp(expo * jnp.float32(-math.log(10000.0)))  # = 1 / 10000**expo
    pos = jnp.arange(max_cell, dtype=jnp.float32)[:, None]   # (C, 1)
    ang = pos * rates[None, :]                                # (C, D)
    return jnp.where((j % 2 == 0)[None, :], jnp.sin(ang), jnp.cos(ang))  # fp32


def _add_pe_kernel(x_ref, pe_ref, o_ref):
    # x_ref / o_ref: (b_blk, c_blk, m_blk, W);  pe_ref: (c_blk, {1|m_blk}, W) fp32.
    # Add in fp32 (PyTorch adds an fp32 pe buffer), cast back to the output dtype.
    x = x_ref[...].astype(jnp.float32)
    o_ref[...] = (x + pe_ref[...][None]).astype(o_ref.dtype)


def _largest_divisor(n, limit, multiple_of=1):
    """Largest d | n with d <= limit and d % multiple_of == 0, else None."""
    best = None
    for d in range(1, n + 1):
        if d > limit:
            break
        if n % d == 0 and d % multiple_of == 0:
            best = d
    return best


def _tpu_budgets():
    """(target x-block bytes, scoped vmem limit, vmem capacity) per generation."""
    try:
        cap = int(pltpu.get_tpu_info().vmem_capacity_bytes)
    except Exception:
        cap = 64 * 1024 * 1024  # conservative (v7x-sized) fallback
    if cap <= 64 * 1024 * 1024:                      # v7x: 64 MiB/TC
        return 8 * 1024 * 1024, 40 * 1024 * 1024, cap
    return 12 * 1024 * 1024, 64 * 1024 * 1024, cap   # v5e / v6e: 128 MiB


def mlm_positional_encode(x, *, donate=False):
    """MLMPositionalEncoder.forward (dropout in eval mode = identity).

    x: (batch, max_cell, max_len, emb_dim) -> same shape / dtype.
    Set donate=True only if the caller donates x at the jit boundary
    (enables in-place aliasing of the output onto the input).
    """
    B, C, L, D = x.shape
    itemsize = jnp.dtype(x.dtype).itemsize
    sub = _SUBLANE.get(itemsize, 8)
    pe = _pe_table(C, D)  # (C, D) fp32

    # ---- lane-dense layout --------------------------------------------------
    if D % _LANE == 0:
        M, W = L, D
        pe_w = pe[:, None, :]                                   # (C, 1, D)
    elif (L * D) % _LANE == 0:
        M, W = (L * D) // _LANE, _LANE
        if _LANE % D == 0:
            pe_w = jnp.tile(pe, (1, _LANE // D))[:, None, :]    # (C, 1, 128)
        else:
            pe_w = jnp.tile(pe, (1, L)).reshape(C, M, _LANE)    # (C, M, 128) full per-cell pe
    else:
        # TODO(synk): last dim < 128 lanes here -> masked partial stores; pad D if it matters.
        M, W = L, D
        pe_w = pe[:, None, :]
    pe_has_m = pe_w.shape[1] != 1
    x_r = x.reshape(B, C, M, W)

    # ---- generation-aware block sizing (coarsen m -> c -> batch) -------------
    target, vmem_limit, vmem_cap = _tpu_budgets()
    row_bytes = W * itemsize
    cell_bytes = M * row_bytes

    if cell_bytes <= target:
        m_blk = M
        c_blk = _largest_divisor(C, max(1, target // cell_bytes)) or 1
        b_blk = _largest_divisor(B, max(1, target // (c_blk * cell_bytes))) or 1
    else:
        # A single cell exceeds the target block: tile the M axis.
        # m_blk must be a sublane multiple (or the full M) for clean tiling.
        c_blk, b_blk = 1, 1
        m_blk = _largest_divisor(M, max(1, target // row_bytes), multiple_of=sub) or M

    # Guarantee >=2 grid blocks so both v7x TensorCores get work.
    if (C // c_blk) * (M // m_blk) * (B // b_blk) == 1:
        if b_blk % 2 == 0:
            b_blk //= 2
        elif c_blk % 2 == 0:
            c_blk //= 2

    # VMEM accounting: x in + out are double buffered (4 live blocks) + pe (2).
    x_blk_bytes = b_blk * c_blk * m_blk * W * itemsize
    pe_blk_bytes = c_blk * (m_blk if pe_has_m else 1) * W * 4
    need = 4 * x_blk_bytes + 2 * pe_blk_bytes + (2 << 20)
    vmem_limit = min(max(vmem_limit, need), max(vmem_cap - (8 << 20), 16 << 20))

    # Batch innermost: the pe block index repeats across consecutive steps,
    # so its (small) DMA is elided.
    grid = (C // c_blk, M // m_blk, B // b_blk)
    x_spec = pl.BlockSpec((b_blk, c_blk, m_blk, W), lambda c, m, b: (b, c, m, 0))
    if pe_has_m:
        pe_spec = pl.BlockSpec((c_blk, m_blk, W), lambda c, m, b: (c, m, 0))
    else:
        pe_spec = pl.BlockSpec((c_blk, 1, W), lambda c, m, b: (c, 0, 0))

    out_r = pl.pallas_call(
        _add_pe_kernel,
        out_shape=jax.ShapeDtypeStruct(x_r.shape, x.dtype),
        grid=grid,
        in_specs=[x_spec, pe_spec],
        out_specs=x_spec,
        compiler_params=pltpu.CompilerParams(
            dimension_semantics=("parallel", "parallel", "parallel"),
            vmem_limit_bytes=int(vmem_limit),
        ),
        input_output_aliases=({0: 0} if donate else {}),
    )(x_r, pe_w)

    # TODO(synk): training-mode dropout (p=0.1) omitted -- module used in eval mode.
    return out_r.reshape(B, C, L, D)


def mlm_positional_encode_ref(x):
    """Pure-JAX reference mirroring the PyTorch forward (dropout in eval mode)."""
    B, C, L, D = x.shape
    j = jnp.arange(D)
    rates = 1.0 / jnp.power(10000.0, ((j // 2) * 2).astype(jnp.float32) / D)  # (D,)
    pos = jnp.arange(C, dtype=jnp.float32)[:, None]                            # (C, 1)
    ang = pos * rates[None, :]                                                 # (C, D)
    pe = jnp.where((j % 2 == 0)[None, :], jnp.sin(ang), jnp.cos(ang))          # (C, D) fp32
    return (x.astype(jnp.float32) + pe[None, :, None, :]).astype(x.dtype)


if __name__ == "__main__":
    key = jax.random.PRNGKey(0)

    # Primary case: 128 % D == 0 (lane-fold path).
    B, max_cell, max_len, emb_dim = 2, 6, 8, 32
    x = jax.random.normal(key, (B, max_cell, max_len, emb_dim), dtype=jnp.float32)
    out = jax.block_until_ready(mlm_positional_encode(x))
    expected = mlm_positional_encode_ref(x)
    assert out.shape == x.shape and out.dtype == x.dtype
    assert jnp.allclose(out, expected, atol=1e-5, rtol=1e-5)

    # Secondary case: (L*D) % 128 == 0 but 128 % D != 0 (full per-cell pe path).
    x2 = jax.random.normal(jax.random.PRNGKey(1), (2, 4, 16, 48), dtype=jnp.float32)
    out2 = jax.block_until_ready(mlm_positional_encode(x2))
    expected2 = mlm_positional_encode_ref(x2)
    assert jnp.allclose(out2, expected2, atol=1e-5, rtol=1e-5)

    print("KERNEL_OK")
</pallas_src>

<mosaic_0001>
module attributes {stable_mosaic.version = 11 : i64} {
  func.func @_add_pe_kernel(%arg0: i32, %arg1: i32, %arg2: i32, %arg3: memref<1x6x2x128xf32, #tpu.memory_space<vmem>>, %arg4: memref<6x1x128xf32, #tpu.memory_space<vmem>>, %arg5: memref<1x6x2x128xf32, #tpu.memory_space<vmem>>) attributes {dimension_semantics = [#tpu.dimension_semantics<parallel>, #tpu.dimension_semantics<parallel>, #tpu.dimension_semantics<parallel>], iteration_bounds = array<i64: 1, 1, 2>, scalar_prefetch = 0 : i64, scratch_operands = 0 : i64, tpu.core_type = #tpu.core_type<tc>, window_params = [{transform_indices = @transform_0, window_bounds = array<i64: 1, 6, 2, 128>}, {transform_indices = @transform_1, window_bounds = array<i64: 6, 1, 128>}, {transform_indices = @transform_2, window_bounds = array<i64: 1, 6, 2, 128>}]} {
    %c0 = arith.constant 0 : index
    %c0_0 = arith.constant 0 : index
    %c0_1 = arith.constant 0 : index
    %c0_2 = arith.constant 0 : index
    %0 = vector.load %arg3[%c0, %c0_0, %c0_1, %c0_2] : memref<1x6x2x128xf32, #tpu.memory_space<vmem>>, vector<1x6x2x128xf32>
    %c0_3 = arith.constant 0 : index
    %c0_4 = arith.constant 0 : index
    %c0_5 = arith.constant 0 : index
    %1 = vector.load %arg4[%c0_3, %c0_4, %c0_5] : memref<6x1x128xf32, #tpu.memory_space<vmem>>, vector<6x1x128xf32>
    %2 = vector.shape_cast %1 : vector<6x1x128xf32> to vector<1x6x1x128xf32>
    %3 = vector.broadcast %2 : vector<1x6x1x128xf32> to vector<1x6x2x128xf32>
    %4 = arith.addf %0, %3 : vector<1x6x2x128xf32>
    %c0_6 = arith.constant 0 : index
    %c0_7 = arith.constant 0 : index
    %c0_8 = arith.constant 0 : index
    %c0_9 = arith.constant 0 : index
    %5 = vector.load %arg5[%c0_6, %c0_7, %c0_8, %c0_9] : memref<1x6x2x128xf32, #tpu.memory_space<vmem>>, vector<1x6x2x128xf32>
    tpu.vector_store %arg5[%c0_6, %c0_7, %c0_8, %c0_9], %4 {strides = array<i32>} : memref<1x6x2x128xf32, #tpu.memory_space<vmem>>, vector<1x6x2x128xf32>,
    return
  }
  func.func @transform_0(%arg0: i32, %arg1: i32, %arg2: i32) -> (i32, i32, i32, i32) {
    %c0_i32 = arith.constant 0 : i32
    %c0_i32_0 = arith.constant 0 : i32
    return %arg2, %arg0, %arg1, %c0_i32 : i32, i32, i32, i32
  }
  func.func @transform_1(%arg0: i32, %arg1: i32, %arg2: i32) -> (i32, i32, i32) {
    %c0_i32 = arith.constant 0 : i32
    %c0_i32_0 = arith.constant 0 : i32
    %c0_i32_1 = arith.constant 0 : i32
    return %arg0, %c0_i32, %c0_i32_0 : i32, i32, i32
  }
  func.func @transform_2(%arg0: i32, %arg1: i32, %arg2: i32) -> (i32, i32, i32, i32) {
    %c0_i32 = arith.constant 0 : i32
    %c0_i32_0 = arith.constant 0 : i32
    return %arg2, %arg0, %arg1, %c0_i32 : i32, i32, i32, i32
  }
}

</mosaic_0001>

<llo_original>
// kernel: tpu_custom_call.1
$region0: #{tpu_custom_call.1}
  #allocation0 [shape = 'u32[]', space=smem, size = 0x4, offset = 0x4, fixed_abs, tag = 'smem constant byte address 0x4 - core index']
  #allocation1 [shape = 'u32[144,128]{1,0:T(1,128)}', space=vmem, size = 0x12000, scoped, tag = 'internal scratch']
  %s0 = inlined_call_operand.hbm [shape: f32[2,6,2,128], index: 0, kind: input, shape index: {}]
  %s1 = inlined_call_operand.hbm [shape: f32[6,1,128], index: 1, kind: input, shape index: {}]
  %s2 = inlined_call_operand.hbm [shape: f32[2,6,2,128], index: 2, kind: output, shape index: {}]
  %s3 = sld [smem:[#allocation0]]
  $region49: #{tpu_custom_call.1} parent=0
    _
  %s5 = ssub.s32 1, %s3
  %s6 = scalar_select 0, %s5, %s3
  $region1: #{tpu_custom_call.1} parent=0
    #allocation2 [shape = 'u8[12288]{0}', space=vmem, size = 0x3000, scoped, tag = 'input window, operand 0']
    #allocation3 [shape = 's32[2]{0}', space=sflag, size = 0x8, scoped, tag = 'scoped memory for tpu_custom_call.1']
    #allocation4 [shape = 's32[2]{0}', space=sflag, size = 0x8, scoped, tag = 'scoped memory for tpu_custom_call.1']
    #allocation5 [shape = 'u8[3072]{0}', space=vmem, size = 0xc00, scoped, tag = 'input window, operand 1, single buffered']
    #allocation6 [shape = 's32[1]{0}', space=sflag, size = 0x4, scoped, tag = 'scoped memory for tpu_custom_call.1']
    #allocation7 [shape = 'u8[12288]{0}', space=vmem, size = 0x3000, scoped, tag = 'output window, operand 0']
    %7 = vsyncpa [#allocation3], 0
    %s8 = scalar_lea.sflag [#allocation3], 1
    %9 = vsyncpa %s8, 0
    %10 = vsyncpa [#allocation6], 0
    %11 = vsyncpa [#allocation4], 0
    %s12 = scalar_lea.sflag [#allocation4], 1
    %13 = vsyncpa %s12, 0
    loop: start=0, step=1, limit=4
    $region2: #{tpu_custom_call.1} parent=1 // loop_pre_header
      _
    $region3: #{tpu_custom_call.1} parent=1 // loop_header
      %s15 = sphi 0, %s19
      %p16 = scmp.ge.s32.totalorder %s15, 4
      %s22 = sphi 0, %s41
      %s23 = sphi 0, %s37
      %s24 = sphi 0, %s33
      %s25 = sphi 0, %s22
      %s26 = sphi 0, %s23
      %s27 = sphi 0, %s24
      %s28 = sphi 0, %s25
      %s29 = sphi 0, %s26
      %s30 = sphi 0, %s27
      %s48 = sphi 0, %s50
      %s51 = sphi 0, %s48
      %s52 = sphi 0, %s51
      %s68 = sphi 0, %s52
      %s74 = sphi 0, %s76
      %s77 = sphi 0, %s74
      %s78 = sphi 0, %s77
      %s94 = sphi 0, %s78
      %s104 = sphi 0, %s106
      %s107 = sphi 0, %s104
      %s108 = sphi 0, %s107
      %s124 = sphi 0, %s108
    $region4: #{tpu_custom_call.1} parent=1 // loop_header_branch
      %18 = sbr.rel (%p16) target = $region8
    $region5: #{tpu_custom_call.1} parent=1 // loop_body
      %s20 = ssub.s32 %s15, 1
      %s21 = ssub.s32 %s15, 2
      %s31 = sadd.s32 1, %s24
      %p32 = scmp.ge.s32.totalorder %s31, 2
      %s33 = scalar_select %p32, 0, %s31
      %s34 = sadd.s32 1, %s23
      %s35 = scalar_select %p32, %s34, %s23
      %p36 = scmp.ge.s32.totalorder %s35, 1
      %s37 = scalar_select %p36, 0, %s35
      %s38 = sadd.s32 1, %s22
      %s39 = scalar_select %p36, %s38, %s22
      %p40 = scmp.ge.s32.totalorder %s39, 1
      %s41 = scalar_select %p40, 0, %s39
      %s42 = ssub.s32 %s24, %s33
      %s43 = ssub.s32 %s22, %s41
      %s44 = sor.u32 %s42, %s43
      %s45 = ssub.s32 %s23, %s37
      %s46 = sor.u32 %s44, %s45
      %p47 = scmp.eq.s32.totalorder %s46, 0
      %s49 = sadd.s32 %s48, 1
      %s50 = scalar_select %p47, %s48, %s49
      %p53 = pneg %p47
      %p54 = scmp.eq.s32.totalorder %s15, 1
      %p55 = por %p53, %p54
      %p56 = scmp.ne.s32.totalorder %s48, %s51
      %p57 = scmp.eq.s32.totalorder %s15, 0
      %p58 = por %p56, %p57
      %p59 = scmp.ne.s32.totalorder %s48, %s51
      %p60 = scmp.eq.s32.totalorder %s20, 1
      %p61 = por %p59, %p60
      %p62 = scmp.ne.s32.totalorder %s51, %s52
      %p63 = scmp.eq.s32.totalorder %s20, 0
      %p64 = por %p62, %p63
      %p65 = scmp.ne.s32.totalorder %s51, %s52
      %p66 = scmp.eq.s32.totalorder %s21, 1
      %p67 = por %p65, %p66
      %p69 = scmp.ne.s32.totalorder %s52, %s68
      %p70 = scmp.eq.s32.totalorder %s21, 0
      %p71 = por %p69, %p70
      %s72 = ssub.s32 %s22, %s41
      %p73 = scmp.eq.s32.totalorder %s72, 0
      %s75 = sadd.s32 %s74, 1
      %s76 = scalar_select %p73, %s74, %s75
      %p79 = pneg %p73
      %p80 = scmp.eq.s32.totalorder %s15, 1
      %p81 = por %p79, %p80
      %p82 = scmp.ne.s32.totalorder %s74, %s77
      %p83 = scmp.eq.s32.totalorder %s15, 0
      %p84 = por %p82, %p83
      %p85 = scmp.ne.s32.totalorder %s74, %s77
      %p86 = scmp.eq.s32.totalorder %s20, 1
      %p87 = por %p85, %p86
      %p88 = scmp.ne.s32.totalorder %s77, %s78
      %p89 = scmp.eq.s32.totalorder %s20, 0
      %p90 = por %p88, %p89
      %p91 = scmp.ne.s32.totalorder %s77, %s78
      %p92 = scmp.eq.s32.totalorder %s21, 1
      %p93 = por %p91, %p92
      %p95 = scmp.ne.s32.totalorder %s78, %s94
      %p96 = scmp.eq.s32.totalorder %s21, 0
      %p97 = por %p95, %p96
      %s98 = ssub.s32 %s24, %s33
      %s99 = ssub.s32 %s22, %s41
      %s100 = sor.u32 %s98, %s99
      %s101 = ssub.s32 %s23, %s37
      %s102 = sor.u32 %s100, %s101
      %p103 = scmp.eq.s32.totalorder %s102, 0
      %s105 = sadd.s32 %s104, 1
      %s106 = scalar_select %p103, %s104, %s105
      %p109 = pneg %p103
      %p110 = scmp.eq.s32.totalorder %s15, 1
      %p111 = por %p109, %p110
      %p112 = scmp.ne.s32.totalorder %s104, %s107
      %p113 = scmp.eq.s32.totalorder %s15, 0
      %p114 = por %p112, %p113
      %p115 = scmp.ne.s32.totalorder %s104, %s107
      %p116 = scmp.eq.s32.totalorder %s20, 1
      %p117 = por %p115, %p116
      %p118 = scmp.ne.s32.totalorder %s107, %s108
      %p119 = scmp.eq.s32.totalorder %s20, 0
      %p120 = por %p118, %p119
      %p121 = scmp.ne.s32.totalorder %s107, %s108
      %p122 = scmp.eq.s32.totalorder %s21, 1
      %p123 = por %p121, %p122
      %p125 = scmp.ne.s32.totalorder %s108, %s124
      %p126 = scmp.eq.s32.totalorder %s21, 0
      %p127 = por %p125, %p126
      %p128 = scmp.le.s32.totalorder 1, %s15
      %p129 = scmp.lt.s32.totalorder %s15, 3
      %p130 = pnand %p128, %p129
      %p131 = pneg %p130
      // Predicated region
      $region9: #{tpu_custom_call.1} parent=5 // pred_check
        _
      $region10: #{tpu_custom_call.1} parent=5 // pred_check_branch
        %133 = sbr.rel (%p130) target = $region12
      $region11: #{tpu_custom_call.1} parent=5 // pred_region
        %s134 = ssub.s32 %s15, 1
        // Predicated region
        $region13: #{tpu_custom_call.1} parent=11 // pred_check
          %p135 = pneg %p90
        $region14: #{tpu_custom_call.1} parent=11 // pred_check_branch
          %137 = sbr.rel (%p135) target = $region16
        $region15: #{tpu_custom_call.1} parent=11 // pred_region
          %s138 = smul.u32 6, %s25
          %s140 = ssub.s32 96, 96
          %141 = vsyncadd [#allocation6], %s140
          %s142 = smul.addr %s138, 16
          %s143 = scalar_lea.hbm %s1, %s142
          %s144 = sshll.u32 [#allocation5], 4
          %s145 = int_to_ptr.vmem [resolvable:$true] %s144
          %150 = dma.hbm_to_vmem [thread:$0]  %s143, 96, %s145, [#allocation6], 16, 16, 1
        $region16: #{tpu_custom_call.1} parent=11 // pred_fallthru
          _
      $region12: #{tpu_custom_call.1} parent=5 // pred_fallthru
        _
      %p151 = scmp.lt.s32.totalorder %s15, 2
      // Predicated region
      $region17: #{tpu_custom_call.1} parent=5 // pred_check
        %p152 = pneg %p151
      $region18: #{tpu_custom_call.1} parent=5 // pred_check_branch
        %154 = sbr.rel (%p152) target = $region20
      $region19: #{tpu_custom_call.1} parent=5 // pred_region
        // Predicated region
        $region21: #{tpu_custom_call.1} parent=19 // pred_check
          %p155 = pneg %p58
        $region22: #{tpu_custom_call.1} parent=19 // pred_check_branch
          %157 = sbr.rel (%p155) target = $region24
        $region23: #{tpu_custom_call.1} parent=19 // pred_region
          %s158 = sand.u32 %s48, 1
          %s159 = scalar_lea.sflag [#allocation3], %s158
          %s160 = sand.u32 %s48, 1
          %s161 = smul.addr %s160, 12
          %s162 = scalar_lea.vmem [#allocation2], %s161
          %s163 = smul.u32 6, %s22
          %s165 = ssub.s32 192, 192
          %166 = vsyncadd %s159, %s165
          %s167 = sadd.s32 %s23, %s163
          %s168 = smul.addr %s24, 6
          %s169 = sadd.s32 %s167, %s168
          %s170 = smul.addr %s169, 32
          %s171 = scalar_lea.hbm %s0, %s170
          %s172 = sshll.u32 %s162, 4
          %s173 = int_to_ptr.vmem [resolvable:$true] %s172
          %178 = dma.hbm_to_vmem [thread:$0]  %s171, 192, %s173, %s159, 32, 32, 2
        $region24: #{tpu_custom_call.1} parent=19 // pred_fallthru
          _
      $region20: #{tpu_custom_call.1} parent=5 // pred_fallthru
        _
      %p179 = scmp.le.s32.totalorder 1, %s15
      %p180 = scmp.lt.s32.totalorder %s15, 3
      %p181 = pnand %p179, %p180
      %p182 = pneg %p181
      // Predicated region
      $region25: #{tpu_custom_call.1} parent=5 // pred_check
        _
      $region26: #{tpu_custom_call.1} parent=5 // pred_check_branch
        %184 = sbr.rel (%p181) target = $region28
      $region27: #{tpu_custom_call.1} parent=5 // pred_region
        %s185 = ssub.s32 %s15, 1
        %s186 = sand.u32 %s51, 1
        %s187 = scalar_lea.sflag [#allocation3], %s186
        %s188 = sand.u32 %s51, 1
        %s189 = smul.addr %s188, 12
        %s190 = scalar_lea.vmem [#allocation2], %s189
        // Predicated region
        $region29: #{tpu_custom_call.1} parent=27 // pred_check
          %p191 = pneg %p64
        $region30: #{tpu_custom_call.1} parent=27 // pred_check_branch
          %193 = sbr.rel (%p191) target = $region32
        $region31: #{tpu_custom_call.1} parent=27 // pred_region
          %194 = dma.done %s187, 192
        $region32: #{tpu_custom_call.1} parent=27 // pred_fallthru
          _
        // Predicated region
        $region33: #{tpu_custom_call.1} parent=27 // pred_check
          %p195 = pneg %p90
        $region34: #{tpu_custom_call.1} parent=27 // pred_check_branch
          %197 = sbr.rel (%p195) target = $region36
        $region35: #{tpu_custom_call.1} parent=27 // pred_region
          %198 = dma.done [#allocation6], 96
        $region36: #{tpu_custom_call.1} parent=27 // pred_fallthru
          _
        %s199 = sand.u32 %s51, 1
        %s200 = scalar_lea.sflag [#allocation3], %s199
        %s201 = sand.u32 %s51, 1
        %s202 = smul.addr %s201, 12
        %s203 = scalar_lea.vmem [#allocation2], %s202
        %p204 = pneg %p64
        %p205 = pneg %p61
        %p206 = pneg %p90
        %p207 = pneg %p87
        %p208 = pneg %p120
        %p209 = pneg %p117
        %s210 = sand.u32 %s107, 1
        %s211 = scalar_lea.sflag [#allocation4], %s210
        %s212 = sand.u32 %s107, 1
        %s213 = smul.addr %s212, 12
        %s214 = scalar_lea.vmem [#allocation7], %s213
        %s215 = smul.u32 6, %s25
        %s216 = smul.u32 6, %s25
        %s217 = smul.u32 6, %s25
        %v218 = vld [vmem:[%s190] sm:$0x3]
        %v219 = vld [vmem:[%s190 + $0x2] sm:$0x3]
        %v220 = vld [vmem:[%s190 + $0x4] sm:$0x3]
        %v221 = vld [vmem:[%s190 + $0x6] sm:$0x3]
        %v222 = vld [vmem:[%s190 + $0x8] sm:$0x3]
        %v223 = vld [vmem:[%s190 + $0xa] sm:$0x3]
        %v224 = vld [vmem:[#allocation5] sm:$0x1]
        %v225 = vld [vmem:[#allocation5 + $0x1] sm:$0x1]
        %v226 = vld [vmem:[#allocation5 + $0x2] sm:$0x1]
        %v227 = vld [vmem:[#allocation5 + $0x3] sm:$0x1]
        %v228 = vld [vmem:[#allocation5 + $0x4] sm:$0x1]
        %v229 = vld [vmem:[#allocation5 + $0x5] sm:$0x1]
        %v236 = vlaneseq
        %v237 = vshrl.u32 %v236, 7
        %v238 = vsub.s32 0, %v237
        %v239 = vrot.slane %v224, %v238
        %v240 = vlaneseq
        %v241 = vshrl.u32 %v240, 7
        %v242 = vsub.s32 0, %v241
        %v243 = vrot.slane %v225, %v242
        %v244 = vlaneseq
        %v245 = vshrl.u32 %v244, 7
        %v246 = vsub.s32 0, %v245
        %v247 = vrot.slane %v226, %v246
        %v248 = vlaneseq
        %v249 = vshrl.u32 %v248, 7
        %v250 = vsub.s32 0, %v249
        %v251 = vrot.slane %v227, %v250
        %v252 = vlaneseq
        %v253 = vshrl.u32 %v252, 7
        %v254 = vsub.s32 0, %v253
        %v255 = vrot.slane %v228, %v254
        %v256 = vlaneseq
        %v257 = vshrl.u32 %v256, 7
        %v258 = vsub.s32 0, %v257
        %v259 = vrot.slane %v229, %v258
        %v266 = vadd.f32 %v218, %v239
        %v267 = vadd.f32 %v219, %v243
        %v268 = vadd.f32 %v220, %v247
        %v269 = vadd.f32 %v221, %v251
        %v270 = vadd.f32 %v222, %v255
        %v271 = vadd.f32 %v223, %v259
        %272 = vst [vmem:[%s214] sm:$0x3] %v266
        %273 = vst [vmem:[%s214 + $0x2] sm:$0x3] %v267
        %274 = vst [vmem:[%s214 + $0x4] sm:$0x3] %v268
        %275 = vst [vmem:[%s214 + $0x6] sm:$0x3] %v269
        %276 = vst [vmem:[%s214 + $0x8] sm:$0x3] %v270
        %277 = vst [vmem:[%s214 + $0xa] sm:$0x3] %v271
        %s278 = sand.u32 %s107, 1
        %s279 = scalar_lea.sflag [#allocation4], %s278
        %s280 = sand.u32 %s107, 1
        %s281 = smul.addr %s280, 12
        %s282 = scalar_lea.vmem [#allocation7], %s281
        // Predicated region
        $region37: #{tpu_custom_call.1} parent=27 // pred_check
          %p283 = pneg %p117
        $region38: #{tpu_custom_call.1} parent=27 // pred_check_branch
          %285 = sbr.rel (%p283) target = $region40
        $region39: #{tpu_custom_call.1} parent=27 // pred_region
          %s286 = smul.u32 6, %s25
          %s288 = ssub.s32 192, 192
          %289 = vsyncadd %s279, %s288
          %s290 = sadd.s32 %s26, %s286
          %s291 = smul.addr %s27, 6
          %s292 = sadd.s32 %s290, %s291
          %s293 = smul.addr %s292, 32
          %s294 = scalar_lea.hbm %s2, %s293
          %s295 = sshll.u32 %s282, 4
          %s296 = int_to_ptr.vmem [resolvable:$true] %s295
          %301 = dma.vmem_to_hbm [thread:$0]  %s296, 192, %s294, %s279, 32, 32, 2
        $region40: #{tpu_custom_call.1} parent=27 // pred_fallthru
          _
      $region28: #{tpu_custom_call.1} parent=5 // pred_fallthru
        _
      %p302 = scmp.le.s32.totalorder 2, %s15
      // Predicated region
      $region41: #{tpu_custom_call.1} parent=5 // pred_check
        %p303 = pneg %p302
      $region42: #{tpu_custom_call.1} parent=5 // pred_check_branch
        %305 = sbr.rel (%p303) target = $region44
      $region43: #{tpu_custom_call.1} parent=5 // pred_region
        %s306 = ssub.s32 %s15, 2
        // Predicated region
        $region45: #{tpu_custom_call.1} parent=43 // pred_check
          %p307 = pneg %p123
        $region46: #{tpu_custom_call.1} parent=43 // pred_check_branch
          %309 = sbr.rel (%p307) target = $region48
        $region47: #{tpu_custom_call.1} parent=43 // pred_region
          %s310 = sand.u32 %s108, 1
          %s311 = scalar_lea.sflag [#allocation4], %s310
          %s312 = sand.u32 %s108, 1
          %s313 = smul.addr %s312, 12
          %s314 = scalar_lea.vmem [#allocation7], %s313
          %315 = dma.done %s311, 192
        $region48: #{tpu_custom_call.1} parent=43 // pred_fallthru
          _
      $region44: #{tpu_custom_call.1} parent=5 // pred_fallthru
        _
    $region6: #{tpu_custom_call.1} parent=1 // loop_footer
      %s19 = sadd.s32 1, %s15
    $region7: #{tpu_custom_call.1} parent=1 // loop_footer_branch
      %14 = sbr.rel target = $region3
    $region8: #{tpu_custom_call.1} parent=1 // loop_exit
      _
    %316 = vsyncpa [#allocation3], 1
    %s317 = scalar_lea.sflag [#allocation3], 1
    %318 = vsyncpa %s317, 1
    %319 = vsyncpa [#allocation6], 1
    %320 = vsyncpa [#allocation4], 1
    %s321 = scalar_lea.sflag [#allocation4], 1
    %322 = vsyncpa %s321, 1

</llo_original>
